<compile_context>
chip_gen: v7x
topology: tpu7x:2x2x1
jax: 0.10.0
libtpu: 0.0.40
codegen_flags: <defaults>
</compile_context>

<pallas_src>
import jax
import jax.numpy as jnp
from jax.experimental import pallas as pl
from jax.experimental.pallas import tpu as pltpu

_LANE = 128
_SUBLANE = 8
_MAX_LANE_WIDTH = 4096           # cap slab width (lanes) when widening
_TARGET_TILE_BYTES = 2 * 1024 * 1024
_MAX_TILE_BYTES = 8 * 1024 * 1024


def _identity_copy_kernel(x_ref, o_ref):
    # Pure elementwise copy of the current VMEM tile.
    o_ref[...] = x_ref[...]


def _identity_pallas_copy(x: jax.Array) -> jax.Array:
    """HBM->VMEM->HBM copy on a lane-dense slab with byte-sized tiles."""
    orig_shape = x.shape
    dtype = x.dtype
    total = x.size
    itemsize = x.dtype.itemsize

    # ---- choose a lane-dense 2D slab (last dim a multiple of 128 lanes) ----
    if total % _LANE == 0:
        rows = total // _LANE
        n = _LANE
        # Widen the lane dim (keeps stores unmasked) while rows split evenly.
        while n < _MAX_LANE_WIDTH and rows % 2 == 0:
            n *= 2
            rows //= 2
        m = rows
    else:
        # Fallback: keep the original trailing dim (correct, less lane-dense).
        if x.ndim >= 2:
            n = orig_shape[-1]
            m = total // n
        else:
            m, n = 1, total

    # ---- tile rows by bytes (~2 MiB per tile) ----
    tm = max(1, _TARGET_TILE_BYTES // (n * itemsize))
    if tm >= m:
        tm = m                                   # full-extent block is always legal
    else:
        tm = max(_SUBLANE, tm - (tm % _SUBLANE))  # keep sublane-aligned blocks

    tile_bytes = tm * n * itemsize
    if tile_bytes > _MAX_TILE_BYTES:
        # Cannot form a VMEM-safe tile (e.g. huge non-128-divisible last dim).
        # Identity is exact either way; skip the copy entirely.
        return x

    x2d = x.reshape(m, n)
    grid = (pl.cdiv(m, tm),)

    out2d = pl.pallas_call(
        _identity_copy_kernel,
        out_shape=jax.ShapeDtypeStruct((m, n), dtype),
        grid_spec=pltpu.PrefetchScalarGridSpec(
            num_scalar_prefetch=0,
            grid=grid,
            in_specs=[pl.BlockSpec((tm, n), lambda i: (i, 0))],
            out_specs=pl.BlockSpec((tm, n), lambda i: (i, 0)),
        ),
        compiler_params=pltpu.CompilerParams(
            dimension_semantics=("parallel",),
        ),
        cost_estimate=pl.CostEstimate(
            flops=0,
            transcendentals=0,
            bytes_accessed=2 * total * itemsize,
        ),
    )(x2d)

    return out2d.reshape(orig_shape)


def identity(x: jax.Array, *, force_pallas: bool = False) -> jax.Array:
    """Pallas implementation of Identity.forward(x) = x.

    Default path returns `x` unchanged (zero data movement — the correct
    "optimization" for identity).  `force_pallas=True` routes through the
    lane-dense Pallas copy kernel for callers that require a pallas_call
    boundary.
    """
    if not force_pallas:
        return x
    if x.ndim == 0 or x.size == 0:
        return x
    return _identity_pallas_copy(x)


if __name__ == "__main__":
    key = jax.random.PRNGKey(0)
    # Small NCHW input consistent with a typical conv-net forward.
    x = jax.random.normal(key, (2, 4, 16, 16), dtype=jnp.float32)

    # Default (recommended) path: zero-cost passthrough.
    y_fast = identity(x)
    jax.block_until_ready(y_fast)
    assert y_fast.shape == x.shape, (y_fast.shape, x.shape)
    assert y_fast.dtype == x.dtype, (y_fast.dtype, x.dtype)
    assert bool(jnp.all(y_fast == x)), "Identity fast-path output mismatch"

    # Exercise the Pallas kernel once (lane-dense slab copy).
    y_kernel = identity(x, force_pallas=True)
    jax.block_until_ready(y_kernel)
    assert y_kernel.shape == x.shape, (y_kernel.shape, x.shape)
    assert y_kernel.dtype == x.dtype, (y_kernel.dtype, x.dtype)
    assert bool(jnp.all(y_kernel == x)), "Identity kernel output mismatch"

    print("KERNEL_OK")
</pallas_src>

<mosaic_0001>
module attributes {stable_mosaic.version = 11 : i64} {
  func.func @_identity_copy_kernel(%arg0: i32, %arg1: memref<1x2048xf32, #tpu.memory_space<vmem>>, %arg2: memref<1x2048xf32, #tpu.memory_space<vmem>>) attributes {dimension_semantics = [#tpu.dimension_semantics<parallel>], iteration_bounds = array<i64: 1>, scalar_prefetch = 0 : i64, scratch_operands = 0 : i64, tpu.core_type = #tpu.core_type<tc>, window_params = [{transform_indices = @transform_0, window_bounds = array<i64: 1, 2048>}, {transform_indices = @transform_1, window_bounds = array<i64: 1, 2048>}]} {
    %c0 = arith.constant 0 : index
    %c0_0 = arith.constant 0 : index
    %0 = vector.load %arg1[%c0, %c0_0] : memref<1x2048xf32, #tpu.memory_space<vmem>>, vector<1x2048xf32>
    %c0_1 = arith.constant 0 : index
    %c0_2 = arith.constant 0 : index
    %1 = vector.load %arg2[%c0_1, %c0_2] : memref<1x2048xf32, #tpu.memory_space<vmem>>, vector<1x2048xf32>
    tpu.vector_store %arg2[%c0_1, %c0_2], %0 {strides = array<i32>} : memref<1x2048xf32, #tpu.memory_space<vmem>>, vector<1x2048xf32>,
    return
  }
  func.func @transform_0(%arg0: i32) -> (i32, i32) {
    %c0_i32 = arith.constant 0 : i32
    %c0_i32_0 = arith.constant 0 : i32
    return %arg0, %c0_i32 : i32, i32
  }
  func.func @transform_1(%arg0: i32) -> (i32, i32) {
    %c0_i32 = arith.constant 0 : i32
    %c0_i32_0 = arith.constant 0 : i32
    return %arg0, %c0_i32 : i32, i32
  }
}

</mosaic_0001>

<llo_original>
// kernel: tpu_custom_call.1
$region0: #{tpu_custom_call.1}
  #allocation0 [shape = 'u32[]', space=smem, size = 0x4, offset = 0x4, fixed_abs, tag = 'smem constant byte address 0x4 - core index']
  #allocation1 [shape = 'u32[144,128]{1,0:T(1,128)}', space=vmem, size = 0x12000, scoped, tag = 'internal scratch']
  %s0 = inlined_call_operand.hbm [shape: f32[1,2048], index: 0, kind: input, shape index: {}]
  %s1 = inlined_call_operand.hbm [shape: f32[1,2048], index: 1, kind: output, shape index: {}]
  %s2 = sld [smem:[#allocation0]]
  $region18: #{tpu_custom_call.1} parent=0
    _
  %s4 = ssub.s32 1, %s2
  %s5 = scalar_select 0, %s4, %s2
  $region1: #{tpu_custom_call.1} parent=0
    #allocation2 [shape = 'u8[8192]{0}', space=vmem, size = 0x2000, scoped, tag = 'input window, operand 0, single buffered']
    #allocation3 [shape = 's32[1]{0}', space=sflag, size = 0x4, scoped, tag = 'scoped memory for tpu_custom_call.1']
    #allocation4 [shape = 's32[1]{0}', space=sflag, size = 0x4, scoped, tag = 'scoped memory for tpu_custom_call.1']
    #allocation5 [shape = 'u8[8192]{0}', space=vmem, size = 0x2000, scoped, tag = 'output window, operand 0, single buffered']
    %6 = vsyncpa [#allocation3], 0
    %7 = vsyncpa [#allocation4], 0
    // Predicated region
    $region2: #{tpu_custom_call.1} parent=1 // pred_check
      _
    $region3: #{tpu_custom_call.1} parent=1 // pred_check_branch
      %9 = sbr.rel (0) target = $region5
    $region4: #{tpu_custom_call.1} parent=1 // pred_region
      %s11 = ssub.s32 256, 256
      %12 = vsyncadd [#allocation3], %s11
      %s14 = sshll.u32 [#allocation2], 4
      %s15 = int_to_ptr.vmem [resolvable:$true] %s14
      %17 = dma.hbm_to_vmem [thread:$0]  %s0, 256, %s15, [#allocation3]
    $region5: #{tpu_custom_call.1} parent=1 // pred_fallthru
      _
    // Predicated region
    $region6: #{tpu_custom_call.1} parent=1 // pred_check
      _
    $region7: #{tpu_custom_call.1} parent=1 // pred_check_branch
      %19 = sbr.rel (0) target = $region9
    $region8: #{tpu_custom_call.1} parent=1 // pred_region
      %20 = dma.done [#allocation3], 256
    $region9: #{tpu_custom_call.1} parent=1 // pred_fallthru
      _
    %v21 = vld [vmem:[#allocation2] sm:$0xff]
    %v22 = vld [vmem:[#allocation2 + $0x8] sm:$0xff]
    %23 = vst [vmem:[#allocation5] sm:$0xff] %v21
    %24 = vst [vmem:[#allocation5 + $0x8] sm:$0xff] %v22
    // Predicated region
    $region10: #{tpu_custom_call.1} parent=1 // pred_check
      _
    $region11: #{tpu_custom_call.1} parent=1 // pred_check_branch
      %26 = sbr.rel (0) target = $region13
    $region12: #{tpu_custom_call.1} parent=1 // pred_region
      %s28 = ssub.s32 256, 256
      %29 = vsyncadd [#allocation4], %s28
      %s31 = sshll.u32 [#allocation5], 4
      %s32 = int_to_ptr.vmem [resolvable:$true] %s31
      %34 = dma.vmem_to_hbm [thread:$0]  %s32, 256, %s1, [#allocation4]
    $region13: #{tpu_custom_call.1} parent=1 // pred_fallthru
      _
    // Predicated region
    $region14: #{tpu_custom_call.1} parent=1 // pred_check
      _
    $region15: #{tpu_custom_call.1} parent=1 // pred_check_branch
      %36 = sbr.rel (0) target = $region17
    $region16: #{tpu_custom_call.1} parent=1 // pred_region
      %37 = dma.done [#allocation4], 256
    $region17: #{tpu_custom_call.1} parent=1 // pred_fallthru
      _
    %38 = vsyncpa [#allocation3], 1
    %39 = vsyncpa [#allocation4], 1

</llo_original>
